<compile_context>
chip_gen: v7x
topology: tpu7x:2x2x1
jax: 0.10.0
libtpu: 0.0.40
codegen_flags: <defaults>
</compile_context>

<pallas_src>
import jax
import jax.numpy as jnp
from jax.experimental import pallas as pl
from jax.experimental.pallas import tpu as pltpu


X_DIM = 7          # Policy2.input1_dim
H1 = 128           # l1 / l1_1 width
OUT_PAD = 128      # lane-dense padded width for the l4 matmul (zero columns)


def _round_up(n, m):
    return ((n + m - 1) // m) * m


def policy2_kernel(x_ref, u_ref, w1_ref, b1_ref, w11_ref, b11_ref,
                   w2_ref, b2_ref, w3_ref, b3_ref, w4_ref, b4_ref, o_ref):
    act = o_ref.shape[-1]

    # layer 1: two small f32 dots (K = 7 / ptb_dim, essentially free on the MXU)
    h1 = jnp.dot(x_ref[...], w1_ref[...], preferred_element_type=jnp.float32)
    h1 = jnp.maximum(h1 + b1_ref[...], 0.0)
    h2 = jnp.dot(u_ref[...], w11_ref[...], preferred_element_type=jnp.float32)
    h2 = jnp.maximum(h2 + b11_ref[...], 0.0)

    # torch.cat([x, u], dim=1) done in-kernel (lane concat of two 128-wide tiles)
    h = jnp.concatenate([h1, h2], axis=1)

    # l2 / l3: bf16 weights & activations, f32 accumulation
    h = jnp.dot(h.astype(jnp.bfloat16), w2_ref[...],
                preferred_element_type=jnp.float32)
    h = jnp.maximum(h + b2_ref[...], 0.0)
    h = jnp.dot(h.astype(jnp.bfloat16), w3_ref[...],
                preferred_element_type=jnp.float32)
    h = jnp.maximum(h + b3_ref[...], 0.0)

    # l4: lane-dense 128-wide dot (zero-padded columns), sliced before bias/softmax
    logits = jnp.dot(h.astype(jnp.bfloat16), w4_ref[...],
                     preferred_element_type=jnp.float32)
    logits = logits[:, :act] + b4_ref[...]

    # numerically-stable softmax over the action lanes, exact normalization
    m = jnp.max(logits, axis=1, keepdims=True)
    e = jnp.exp(logits - m)
    s = jnp.sum(e, axis=1, keepdims=True)
    o_ref[...] = (e * (1.0 / s)).astype(o_ref.dtype)


def prepare_params(params, ptb_dim, action_dim):
    """One-time preprocessing: pad/cast weights (kept out of the per-call path)."""
    (w1, b1, w11, b11, w2, b2, w3, b3, w4, b4) = params
    # l4 weight padded to a lane-dense 128-wide MXU operand; padded columns are
    # zero and are sliced away inside the kernel before bias/softmax.
    w4p = jnp.zeros((w4.shape[0], OUT_PAD), jnp.float32).at[:, :action_dim].set(w4)
    bf = jnp.bfloat16
    return (w1, b1,                      # layer-1 stays f32 (tiny K)
            w11, b11,
            w2.astype(bf), b2,
            w3.astype(bf), b3,
            w4p.astype(bf), b4)


def _choose_batch_tile(B, batch_tile):
    if B <= 512:
        # small batch: single tile, rounded to the 8-sublane granule
        return _round_up(B, 8)
    bt = _round_up(min(batch_tile, B), 256)        # MXU row alignment (v6e/v7x)
    # v7x has 2 TensorCores: make sure the "parallel" grid axis has >= 2 steps
    if _round_up(B, bt) // bt < 2:
        bt = _round_up(pl.cdiv(B, 2), 256)
    return bt


def policy2_forward(x, u, prepared, action_dim, *, batch_tile=1024):
    (w1, b1, w11, b11, w2, b2, w3, b3, w4p, b4) = prepared
    B = x.shape[0]
    ptb_dim = u.shape[1]

    bt = _choose_batch_tile(B, batch_tile)
    Bp = _round_up(B, bt)
    if Bp != B:
        # zero-padded rows flow through harmlessly (finite logits) and are sliced off
        x = jnp.pad(x, ((0, Bp - B), (0, 0)))
        u = jnp.pad(u, ((0, Bp - B), (0, 0)))
    grid = (Bp // bt,)

    def resident(shape):
        nd = len(shape)
        return pl.BlockSpec(shape, lambda i, _nd=nd: (0,) * _nd)

    out = pl.pallas_call(
        policy2_kernel,
        out_shape=jax.ShapeDtypeStruct((Bp, action_dim), jnp.float32),
        grid=grid,
        in_specs=[
            pl.BlockSpec((bt, X_DIM), lambda i: (i, 0)),     # x
            pl.BlockSpec((bt, ptb_dim), lambda i: (i, 0)),   # u
            resident(w1.shape), resident(b1.shape),
            resident(w11.shape), resident(b11.shape),
            resident(w2.shape), resident(b2.shape),
            resident(w3.shape), resident(b3.shape),
            resident(w4p.shape), resident(b4.shape),
        ],
        out_specs=pl.BlockSpec((bt, action_dim), lambda i: (i, 0)),
        compiler_params=pltpu.CompilerParams(
            dimension_semantics=("parallel",)),
    )(x, u, w1, b1, w11, b11, w2, b2, w3, b3, w4p, b4)

    return out[:B]


def init_params(key, ptb_dim, action_dim):
    """Deterministic init mimicking nn.Linear's U(-1/sqrt(fan_in), 1/sqrt(fan_in)).

    Weights stored as (in_features, out_features); biases as (1, out_features)."""
    def linear(k, fan_in, fan_out):
        kw, kb = jax.random.split(k)
        bound = 1.0 / jnp.sqrt(fan_in)
        w = jax.random.uniform(kw, (fan_in, fan_out), jnp.float32, -bound, bound)
        b = jax.random.uniform(kb, (1, fan_out), jnp.float32, -bound, bound)
        return w, b

    k1, k2, k3, k4, k5 = jax.random.split(key, 5)
    w1, b1 = linear(k1, X_DIM, 128)
    w11, b11 = linear(k2, ptb_dim, 128)
    w2, b2 = linear(k3, 256, 256)
    w3, b3 = linear(k4, 256, 128)
    w4, b4 = linear(k5, 128, action_dim)
    return (w1, b1, w11, b11, w2, b2, w3, b3, w4, b4)


def policy2_reference(x, u, params):
    """Pure-JAX f32 reference mirroring the PyTorch forward."""
    (w1, b1, w11, b11, w2, b2, w3, b3, w4, b4) = params
    h1 = jax.nn.relu(x @ w1 + b1)
    h2 = jax.nn.relu(u @ w11 + b11)
    h = jax.nn.relu(jnp.concatenate([h1, h2], axis=1) @ w2 + b2)
    h = jax.nn.relu(h @ w3 + b3)
    logits = h @ w4 + b4
    return jax.nn.softmax(logits, axis=1)


if __name__ == "__main__":
    ptb_dim = 16
    action_dim = 8
    batch = 8

    key = jax.random.PRNGKey(0)
    kx, ku, kp = jax.random.split(key, 3)

    x = jax.random.normal(kx, (batch, X_DIM), jnp.float32)
    u = jax.random.normal(ku, (batch, ptb_dim), jnp.float32)
    params = init_params(kp, ptb_dim, action_dim)
    prepared = prepare_params(params, ptb_dim, action_dim)

    out = policy2_forward(x, u, prepared, action_dim)
    out = jax.block_until_ready(out)

    ref = policy2_reference(x, u, params)
    assert out.shape == (batch, action_dim)
    # exact softmax normalization: rows sum to 1
    assert jnp.allclose(jnp.sum(out, axis=1), 1.0, atol=1e-5)
    # bf16 weights/activations in l2-l4 -> loosened tolerance vs f32 reference
    assert jnp.allclose(out, ref, atol=2e-2, rtol=2e-2)

    print("KERNEL_OK")
</pallas_src>

<mosaic_0001>
module attributes {stable_mosaic.version = 11 : i64} {
  func.func @policy2_kernel(%arg0: i32, %arg1: memref<8x7xf32, #tpu.memory_space<vmem>>, %arg2: memref<8x16xf32, #tpu.memory_space<vmem>>, %arg3: memref<7x128xf32, #tpu.memory_space<vmem>>, %arg4: memref<1x128xf32, #tpu.memory_space<vmem>>, %arg5: memref<16x128xf32, #tpu.memory_space<vmem>>, %arg6: memref<1x128xf32, #tpu.memory_space<vmem>>, %arg7: memref<256x256xbf16, #tpu.memory_space<vmem>>, %arg8: memref<1x256xf32, #tpu.memory_space<vmem>>, %arg9: memref<256x128xbf16, #tpu.memory_space<vmem>>, %arg10: memref<1x128xf32, #tpu.memory_space<vmem>>, %arg11: memref<128x128xbf16, #tpu.memory_space<vmem>>, %arg12: memref<1x8xf32, #tpu.memory_space<vmem>>, %arg13: memref<8x8xf32, #tpu.memory_space<vmem>>) attributes {dimension_semantics = [#tpu.dimension_semantics<parallel>], iteration_bounds = array<i64: 1>, scalar_prefetch = 0 : i64, scratch_operands = 0 : i64, tpu.core_type = #tpu.core_type<tc>, window_params = [{transform_indices = @transform_0, window_bounds = array<i64: 8, 7>}, {transform_indices = @transform_1, window_bounds = array<i64: 8, 16>}, {pipeline_mode = #tpu.pipeline_mode<synchronous>, transform_indices = @transform_2, window_bounds = array<i64: 7, 128>}, {pipeline_mode = #tpu.pipeline_mode<synchronous>, transform_indices = @transform_3, window_bounds = array<i64: 1, 128>}, {pipeline_mode = #tpu.pipeline_mode<synchronous>, transform_indices = @transform_4, window_bounds = array<i64: 16, 128>}, {pipeline_mode = #tpu.pipeline_mode<synchronous>, transform_indices = @transform_5, window_bounds = array<i64: 1, 128>}, {pipeline_mode = #tpu.pipeline_mode<synchronous>, transform_indices = @transform_6, window_bounds = array<i64: 256, 256>}, {pipeline_mode = #tpu.pipeline_mode<synchronous>, transform_indices = @transform_7, window_bounds = array<i64: 1, 256>}, {pipeline_mode = #tpu.pipeline_mode<synchronous>, transform_indices = @transform_8, window_bounds = array<i64: 256, 128>}, {pipeline_mode = #tpu.pipeline_mode<synchronous>, transform_indices = @transform_9, window_bounds = array<i64: 1, 128>}, {pipeline_mode = #tpu.pipeline_mode<synchronous>, transform_indices = @transform_10, window_bounds = array<i64: 128, 128>}, {pipeline_mode = #tpu.pipeline_mode<synchronous>, transform_indices = @transform_11, window_bounds = array<i64: 1, 8>}, {transform_indices = @transform_12, window_bounds = array<i64: 8, 8>}]} {
    %c0 = arith.constant 0 : index
    %c0_0 = arith.constant 0 : index
    %0 = vector.load %arg1[%c0, %c0_0] : memref<8x7xf32, #tpu.memory_space<vmem>>, vector<8x7xf32>
    %c0_1 = arith.constant 0 : index
    %c0_2 = arith.constant 0 : index
    %1 = vector.load %arg3[%c0_1, %c0_2] : memref<7x128xf32, #tpu.memory_space<vmem>>, vector<7x128xf32>
    %cst = arith.constant dense<0.000000e+00> : vector<8x128xf32>
    %2 = tpu.matmul %0, %1, %cst {dimension_numbers = #tpu.dot_dimension_numbers<[1], [0], [0], [1], [0, 0, 1, 1], [], []>} : vector<8x7xf32>, vector<7x128xf32>, vector<8x128xf32> -> vector<8x128xf32>
    %c0_3 = arith.constant 0 : index
    %c0_4 = arith.constant 0 : index
    %3 = vector.load %arg4[%c0_3, %c0_4] : memref<1x128xf32, #tpu.memory_space<vmem>>, vector<1x128xf32>
    %4 = vector.broadcast %3 : vector<1x128xf32> to vector<8x128xf32>
    %5 = arith.addf %2, %4 : vector<8x128xf32>
    %cst_5 = arith.constant 0.000000e+00 : f32
    %6 = vector.broadcast %cst_5 : f32 to vector<8x128xf32>
    %7 = arith.maximumf %5, %6 : vector<8x128xf32>
    %c0_6 = arith.constant 0 : index
    %c0_7 = arith.constant 0 : index
    %8 = vector.load %arg2[%c0_6, %c0_7] : memref<8x16xf32, #tpu.memory_space<vmem>>, vector<8x16xf32>
    %c0_8 = arith.constant 0 : index
    %c0_9 = arith.constant 0 : index
    %9 = vector.load %arg5[%c0_8, %c0_9] : memref<16x128xf32, #tpu.memory_space<vmem>>, vector<16x128xf32>
    %cst_10 = arith.constant dense<0.000000e+00> : vector<8x128xf32>
    %10 = tpu.matmul %8, %9, %cst_10 {dimension_numbers = #tpu.dot_dimension_numbers<[1], [0], [0], [1], [0, 0, 1, 1], [], []>} : vector<8x16xf32>, vector<16x128xf32>, vector<8x128xf32> -> vector<8x128xf32>
    %c0_11 = arith.constant 0 : index
    %c0_12 = arith.constant 0 : index
    %11 = vector.load %arg6[%c0_11, %c0_12] : memref<1x128xf32, #tpu.memory_space<vmem>>, vector<1x128xf32>
    %12 = vector.broadcast %11 : vector<1x128xf32> to vector<8x128xf32>
    %13 = arith.addf %10, %12 : vector<8x128xf32>
    %cst_13 = arith.constant 0.000000e+00 : f32
    %14 = vector.broadcast %cst_13 : f32 to vector<8x128xf32>
    %15 = arith.maximumf %13, %14 : vector<8x128xf32>
    %16 = tpu.concatenate %7, %15 in 1 : vector<8x128xf32>, vector<8x128xf32> -> vector<8x256xf32>
    %17 = arith.truncf %16 : vector<8x256xf32> to vector<8x256xbf16>
    %c0_14 = arith.constant 0 : index
    %c0_15 = arith.constant 0 : index
    %18 = vector.load %arg7[%c0_14, %c0_15] : memref<256x256xbf16, #tpu.memory_space<vmem>>, vector<256x256xbf16>
    %cst_16 = arith.constant dense<0.000000e+00> : vector<8x256xf32>
    %19 = tpu.matmul %17, %18, %cst_16 {dimension_numbers = #tpu.dot_dimension_numbers<[1], [0], [0], [1], [0, 0, 1, 1], [], []>} : vector<8x256xbf16>, vector<256x256xbf16>, vector<8x256xf32> -> vector<8x256xf32>
    %c0_17 = arith.constant 0 : index
    %c0_18 = arith.constant 0 : index
    %20 = vector.load %arg8[%c0_17, %c0_18] : memref<1x256xf32, #tpu.memory_space<vmem>>, vector<1x256xf32>
    %21 = vector.broadcast %20 : vector<1x256xf32> to vector<8x256xf32>
    %22 = arith.addf %19, %21 : vector<8x256xf32>
    %cst_19 = arith.constant 0.000000e+00 : f32
    %23 = vector.broadcast %cst_19 : f32 to vector<8x256xf32>
    %24 = arith.maximumf %22, %23 : vector<8x256xf32>
    %25 = arith.truncf %24 : vector<8x256xf32> to vector<8x256xbf16>
    %c0_20 = arith.constant 0 : index
    %c0_21 = arith.constant 0 : index
    %26 = vector.load %arg9[%c0_20, %c0_21] : memref<256x128xbf16, #tpu.memory_space<vmem>>, vector<256x128xbf16>
    %cst_22 = arith.constant dense<0.000000e+00> : vector<8x128xf32>
    %27 = tpu.matmul %25, %26, %cst_22 {dimension_numbers = #tpu.dot_dimension_numbers<[1], [0], [0], [1], [0, 0, 1, 1], [], []>} : vector<8x256xbf16>, vector<256x128xbf16>, vector<8x128xf32> -> vector<8x128xf32>
    %c0_23 = arith.constant 0 : index
    %c0_24 = arith.constant 0 : index
    %28 = vector.load %arg10[%c0_23, %c0_24] : memref<1x128xf32, #tpu.memory_space<vmem>>, vector<1x128xf32>
    %29 = vector.broadcast %28 : vector<1x128xf32> to vector<8x128xf32>
    %30 = arith.addf %27, %29 : vector<8x128xf32>
    %cst_25 = arith.constant 0.000000e+00 : f32
    %31 = vector.broadcast %cst_25 : f32 to vector<8x128xf32>
    %32 = arith.maximumf %30, %31 : vector<8x128xf32>
    %33 = arith.truncf %32 : vector<8x128xf32> to vector<8x128xbf16>
    %c0_26 = arith.constant 0 : index
    %c0_27 = arith.constant 0 : index
    %34 = vector.load %arg11[%c0_26, %c0_27] : memref<128x128xbf16, #tpu.memory_space<vmem>>, vector<128x128xbf16>
    %cst_28 = arith.constant dense<0.000000e+00> : vector<8x128xf32>
    %35 = tpu.matmul %33, %34, %cst_28 {dimension_numbers = #tpu.dot_dimension_numbers<[1], [0], [0], [1], [0, 0, 1, 1], [], []>} : vector<8x128xbf16>, vector<128x128xbf16>, vector<8x128xf32> -> vector<8x128xf32>
    %36 = vector.extract_strided_slice %35 {offsets = [0, 0], sizes = [8, 8], strides = [1, 1]} : vector<8x128xf32> to vector<8x8xf32>
    %c0_29 = arith.constant 0 : index
    %c0_30 = arith.constant 0 : index
    %37 = vector.load %arg12[%c0_29, %c0_30] : memref<1x8xf32, #tpu.memory_space<vmem>>, vector<1x8xf32>
    %38 = vector.broadcast %37 : vector<1x8xf32> to vector<8x8xf32>
    %39 = arith.addf %36, %38 : vector<8x8xf32>
    %cst_31 = arith.constant dense<0xFF800000> : vector<8xf32>
    %40 = vector.multi_reduction <maximumf>, %39, %cst_31 [1] : vector<8x8xf32> to vector<8xf32>
    %41 = vector.shape_cast %40 : vector<8xf32> to vector<8x1xf32>
    %42 = vector.broadcast %41 : vector<8x1xf32> to vector<8x8xf32>
    %43 = arith.subf %39, %42 : vector<8x8xf32>
    %44 = math.exp %43 : vector<8x8xf32>
    %cst_32 = arith.constant dense<0.000000e+00> : vector<8xf32>
    %45 = vector.multi_reduction <add>, %44, %cst_32 [1] : vector<8x8xf32> to vector<8xf32>
    %46 = vector.shape_cast %45 : vector<8xf32> to vector<8x1xf32>
    %cst_33 = arith.constant 1.000000e+00 : f32
    %47 = vector.broadcast %cst_33 : f32 to vector<8x1xf32>
    %48 = arith.divf %47, %46 : vector<8x1xf32>
    %49 = vector.broadcast %48 : vector<8x1xf32> to vector<8x8xf32>
    %50 = arith.mulf %44, %49 : vector<8x8xf32>
    %c0_34 = arith.constant 0 : index
    %c0_35 = arith.constant 0 : index
    %51 = vector.load %arg13[%c0_34, %c0_35] : memref<8x8xf32, #tpu.memory_space<vmem>>, vector<8x8xf32>
    tpu.vector_store %arg13[%c0_34, %c0_35], %50 {strides = array<i32>} : memref<8x8xf32, #tpu.memory_space<vmem>>, vector<8x8xf32>,
    return
  }
  func.func @transform_0(%arg0: i32) -> (i32, i32) {
    %c0_i32 = arith.constant 0 : i32
    %c0_i32_0 = arith.constant 0 : i32
    return %arg0, %c0_i32 : i32, i32
  }
  func.func @transform_1(%arg0: i32) -> (i32, i32) {
    %c0_i32 = arith.constant 0 : i32
    %c0_i32_0 = arith.constant 0 : i32
    return %arg0, %c0_i32 : i32, i32
  }
  func.func @transform_2(%arg0: i32) -> (i32, i32) {
    %c0_i32 = arith.constant 0 : i32
    %c0_i32_0 = arith.constant 0 : i32
    %c0_i32_1 = arith.constant 0 : i32
    return %c0_i32, %c0_i32_0 : i32, i32
  }
  func.func @transform_3(%arg0: i32) -> (i32, i32) {
    %c0_i32 = arith.constant 0 : i32
    %c0_i32_0 = arith.constant 0 : i32
    %c0_i32_1 = arith.constant 0 : i32
    return %c0_i32, %c0_i32_0 : i32, i32
  }
  func.func @transform_4(%arg0: i32) -> (i32, i32) {
    %c0_i32 = arith.constant 0 : i32
    %c0_i32_0 = arith.constant 0 : i32
    %c0_i32_1 = arith.constant 0 : i32
    return %c0_i32, %c0_i32_0 : i32, i32
  }
  func.func @transform_5(%arg0: i32) -> (i32, i32) {
    %c0_i32 = arith.constant 0 : i32
    %c0_i32_0 = arith.constant 0 : i32
    %c0_i32_1 = arith.constant 0 : i32
    return %c0_i32, %c0_i32_0 : i32, i32
  }
  func.func @transform_6(%arg0: i32) -> (i32, i32) {
    %c0_i32 = arith.constant 0 : i32
    %c0_i32_0 = arith.constant 0 : i32
    %c0_i32_1 = arith.constant 0 : i32
    return %c0_i32, %c0_i32_0 : i32, i32
  }
  func.func @transform_7(%arg0: i32) -> (i32, i32) {
    %c0_i32 = arith.constant 0 : i32
    %c0_i32_0 = arith.constant 0 : i32
    %c0_i32_1 = arith.constant 0 : i32
    return %c0_i32, %c0_i32_0 : i32, i32
  }
  func.func @transform_8(%arg0: i32) -> (i32, i32) {
    %c0_i32 = arith.constant 0 : i32
    %c0_i32_0 = arith.constant 0 : i32
    %c0_i32_1 = arith.constant 0 : i32
    return %c0_i32, %c0_i32_0 : i32, i32
  }
  func.func @transform_9(%arg0: i32) -> (i32, i32) {
    %c0_i32 = arith.constant 0 : i32
    %c0_i32_0 = arith.constant 0 : i32
    %c0_i32_1 = arith.constant 0 : i32
    return %c0_i32, %c0_i32_0 : i32, i32
  }
  func.func @transform_10(%arg0: i32) -> (i32, i32) {
    %c0_i32 = arith.constant 0 : i32
    %c0_i32_0 = arith.constant 0 : i32
    %c0_i32_1 = arith.constant 0 : i32
    return %c0_i32, %c0_i32_0 : i32, i32
  }
  func.func @transform_11(%arg0: i32) -> (i32, i32) {
    %c0_i32 = arith.constant 0 : i32
    %c0_i32_0 = arith.constant 0 : i32
    %c0_i32_1 = arith.constant 0 : i32
    return %c0_i32, %c0_i32_0 : i32, i32
  }
  func.func @transform_12(%arg0: i32) -> (i32, i32) {
    %c0_i32 = arith.constant 0 : i32
    %c0_i32_0 = arith.constant 0 : i32
    return %arg0, %c0_i32 : i32, i32
  }
}

</mosaic_0001>

<llo_original>
// kernel: tpu_custom_call.1
$region0: #{tpu_custom_call.1}
  #allocation0 [shape = 'u32[]', space=smem, size = 0x4, offset = 0x4, fixed_abs, tag = 'smem constant byte address 0x4 - core index']
  #allocation1 [shape = 'u32[144,128]{1,0:T(1,128)}', space=vmem, size = 0x12000, scoped, tag = 'internal scratch']
  %s0 = inlined_call_operand.hbm [shape: f32[8,7], index: 0, kind: input, shape index: {}]
  %s1 = inlined_call_operand.hbm [shape: f32[8,16], index: 1, kind: input, shape index: {}]
  %s2 = inlined_call_operand.hbm [shape: f32[7,128], index: 2, kind: input, shape index: {}]
  %s3 = inlined_call_operand.vmem [shape: f32[1,128], index: 3, kind: input, shape index: {}]
  %s4 = inlined_call_operand.hbm [shape: f32[16,128], index: 4, kind: input, shape index: {}]
  %s5 = inlined_call_operand.vmem [shape: f32[1,128], index: 5, kind: input, shape index: {}]
  %s6 = inlined_call_operand.hbm [shape: bf16[256,256], index: 6, kind: input, shape index: {}]
  %s7 = inlined_call_operand.vmem [shape: f32[1,256], index: 7, kind: input, shape index: {}]
  %s8 = inlined_call_operand.hbm [shape: bf16[256,128], index: 8, kind: input, shape index: {}]
  %s9 = inlined_call_operand.vmem [shape: f32[1,128], index: 9, kind: input, shape index: {}]
  %s10 = inlined_call_operand.hbm [shape: bf16[128,128], index: 10, kind: input, shape index: {}]
  %s11 = inlined_call_operand.vmem [shape: f32[1,8], index: 11, kind: input, shape index: {}]
  %s12 = inlined_call_operand.hbm [shape: f32[8,8], index: 12, kind: output, shape index: {}]
  %s13 = sld [smem:[#allocation0]]
  $region86: #{tpu_custom_call.1} parent=0
    _
  %s15 = ssub.s32 1, %s13
  %s16 = scalar_select 0, %s15, %s13
  $region1: #{tpu_custom_call.1} parent=0
    #allocation2 [shape = 'u8[4096]{0}', space=vmem, size = 0x1000, scoped, tag = 'input window, operand 0, single buffered']
    #allocation3 [shape = 's32[1]{0}', space=sflag, size = 0x4, scoped, tag = 'scoped memory for tpu_custom_call.1']
    #allocation4 [shape = 's32[1]{0}', space=sflag, size = 0x4, scoped, tag = 'scoped memory for tpu_custom_call.1']
    #allocation5 [shape = 'u8[4096]{0}', space=vmem, size = 0x1000, scoped, tag = 'input window, operand 1, single buffered']
    #allocation6 [shape = 's32[1]{0}', space=sflag, size = 0x4, scoped, tag = 'scoped memory for tpu_custom_call.1']
    #allocation7 [shape = 'u8[4096]{0}', space=vmem, size = 0x1000, scoped, tag = 'input window, operand 2, single buffered']
    #allocation8 [shape = 'u8[8192]{0}', space=vmem, size = 0x2000, scoped, tag = 'input window, operand 4, single buffered']
    #allocation9 [shape = 's32[1]{0}', space=sflag, size = 0x4, scoped, tag = 'scoped memory for tpu_custom_call.1']
    #allocation10 [shape = 'u8[131072]{0}', space=vmem, size = 0x20000, scoped, tag = 'input window, operand 6, single buffered']
    #allocation11 [shape = 'u8[65536]{0}', space=vmem, size = 0x10000, scoped, tag = 'input window, operand 8, single buffered']
    #allocation12 [shape = 's32[1]{0}', space=sflag, size = 0x4, scoped, tag = 'scoped memory for tpu_custom_call.1']
    #allocation13 [shape = 'u8[32768]{0}', space=vmem, size = 0x8000, scoped, tag = 'input window, operand 10, single buffered']
    #allocation14 [shape = 'u8[4096]{0}', space=vmem, size = 0x1000, scoped, tag = 'output window, operand 0, single buffered']
    %17 = vsyncpa [#allocation3], 0
    %18 = vsyncpa [#allocation6], 0
    %19 = vsyncpa [#allocation9], 0
    %20 = vsyncpa [#allocation12], 0
    %21 = vsyncpa [#allocation4], 0
    // Predicated region
    $region2: #{tpu_custom_call.1} parent=1 // pred_check
      _
    $region3: #{tpu_custom_call.1} parent=1 // pred_check_branch
      %23 = sbr.rel (0) target = $region5
    $region4: #{tpu_custom_call.1} parent=1 // pred_region
      %s25 = ssub.s32 128, 128
      %26 = vsyncadd [#allocation3], %s25
      %s28 = sshll.u32 [#allocation2], 4
      %s29 = int_to_ptr.vmem [resolvable:$true] %s28
      %31 = dma.hbm_to_vmem [thread:$0]  %s0, 128, %s29, [#allocation3]
    $region5: #{tpu_custom_call.1} parent=1 // pred_fallthru
      _
    // Predicated region
    $region6: #{tpu_custom_call.1} parent=1 // pred_check
      _
    $region7: #{tpu_custom_call.1} parent=1 // pred_check_branch
      %33 = sbr.rel (0) target = $region9
    $region8: #{tpu_custom_call.1} parent=1 // pred_region
      %s35 = ssub.s32 128, 128
      %36 = vsyncadd [#allocation6], %s35
      %s38 = sshll.u32 [#allocation5], 4
      %s39 = int_to_ptr.vmem [resolvable:$true] %s38
      %41 = dma.hbm_to_vmem [thread:$0]  %s1, 128, %s39, [#allocation6]
    $region9: #{tpu_custom_call.1} parent=1 // pred_fallthru
      _
    // Predicated region
    $region10: #{tpu_custom_call.1} parent=1 // pred_check
      _
    $region11: #{tpu_custom_call.1} parent=1 // pred_check_branch
      %43 = sbr.rel (0) target = $region13
    $region12: #{tpu_custom_call.1} parent=1 // pred_region
      %s45 = ssub.s32 128, 128
      %46 = vsyncadd [#allocation6], %s45
      %s48 = sshll.u32 [#allocation7], 4
      %s49 = int_to_ptr.vmem [resolvable:$true] %s48
      %51 = dma.hbm_to_vmem [thread:$0]  %s2, 128, %s49, [#allocation6]
    $region13: #{tpu_custom_call.1} parent=1 // pred_fallthru
      _
    // Predicated region
    $region14: #{tpu_custom_call.1} parent=1 // pred_check
      _
    $region15: #{tpu_custom_call.1} parent=1 // pred_check_branch
      %53 = sbr.rel (0) target = $region17
    $region16: #{tpu_custom_call.1} parent=1 // pred_region
      _
    $region17: #{tpu_custom_call.1} parent=1 // pred_fallthru
      _
    // Predicated region
    $region18: #{tpu_custom_call.1} parent=1 // pred_check
      _
    $region19: #{tpu_custom_call.1} parent=1 // pred_check_branch
      %55 = sbr.rel (0) target = $region21
    $region20: #{tpu_custom_call.1} parent=1 // pred_region
      %s57 = ssub.s32 256, 256
      %58 = vsyncadd [#allocation9], %s57
      %s59 = sshll.u32 [#allocation8], 4
      %s60 = int_to_ptr.vmem [resolvable:$true] %s59
      %65 = dma.hbm_to_vmem [thread:$0]  %s4, 256, %s60, [#allocation9], 128, 128, 8
    $region21: #{tpu_custom_call.1} parent=1 // pred_fallthru
      _
    // Predicated region
    $region22: #{tpu_custom_call.1} parent=1 // pred_check
      _
    $region23: #{tpu_custom_call.1} parent=1 // pred_check_branch
      %67 = sbr.rel (0) target = $region25
    $region24: #{tpu_custom_call.1} parent=1 // pred_region
      _
    $region25: #{tpu_custom_call.1} parent=1 // pred_fallthru
      _
    // Predicated region
    $region26: #{tpu_custom_call.1} parent=1 // pred_check
      _
    $region27: #{tpu_custom_call.1} parent=1 // pred_check_branch
      %69 = sbr.rel (0) target = $region29
    $region28: #{tpu_custom_call.1} parent=1 // pred_region
      %s71 = ssub.s32 4096, 4096
      %72 = vsyncadd [#allocation9], %s71
      %s73 = sshll.u32 [#allocation10], 4
      %s74 = int_to_ptr.vmem [resolvable:$true] %s73
      %79 = dma.hbm_to_vmem [thread:$0]  %s6, 4096, %s74, [#allocation9], 128, 128, 8
    $region29: #{tpu_custom_call.1} parent=1 // pred_fallthru
      _
    // Predicated region
    $region30: #{tpu_custom_call.1} parent=1 // pred_check
      _
    $region31: #{tpu_custom_call.1} parent=1 // pred_check_branch
      %81 = sbr.rel (0) target = $region33
    $region32: #{tpu_custom_call.1} parent=1 // pred_region
      _
    $region33: #{tpu_custom_call.1} parent=1 // pred_fallthru
      _
    // Predicated region
    $region34: #{tpu_custom_call.1} parent=1 // pred_check
      _
    $region35: #{tpu_custom_call.1} parent=1 // pred_check_branch
      %83 = sbr.rel (0) target = $region37
    $region36: #{tpu_custom_call.1} parent=1 // pred_region
      %s85 = ssub.s32 2048, 2048
      %86 = vsyncadd [#allocation12], %s85
      %s87 = sshll.u32 [#allocation11], 4
      %s88 = int_to_ptr.vmem [resolvable:$true] %s87
      %93 = dma.hbm_to_vmem [thread:$0]  %s8, 2048, %s88, [#allocation12], 64, 64, 4
    $region37: #{tpu_custom_call.1} parent=1 // pred_fallthru
      _
    // Predicated region
    $region38: #{tpu_custom_call.1} parent=1 // pred_check
      _
    $region39: #{tpu_custom_call.1} parent=1 // pred_check_branch
      %95 = sbr.rel (0) target = $region41
    $region40: #{tpu_custom_call.1} parent=1 // pred_region
      _
    $region41: #{tpu_custom_call.1} parent=1 // pred_fallthru
      _
    // Predicated region
    $region42: #{tpu_custom_call.1} parent=1 // pred_check
      _
    $region43: #{tpu_custom_call.1} parent=1 // pred_check_branch
      %97 = sbr.rel (0) target = $region45
    $region44: #{tpu_custom_call.1} parent=1 // pred_region
      %s99 = ssub.s32 1024, 1024
      %100 = vsyncadd [#allocation12], %s99
      %s101 = sshll.u32 [#allocation13], 4
      %s102 = int_to_ptr.vmem [resolvable:$true] %s101
      %107 = dma.hbm_to_vmem [thread:$0]  %s10, 1024, %s102, [#allocation12], 64, 64, 4
    $region45: #{tpu_custom_call.1} parent=1 // pred_fallthru
      _
    // Predicated region
    $region46: #{tpu_custom_call.1} parent=1 // pred_check
      _
    $region47: #{tpu_custom_call.1} parent=1 // pred_check_branch
      %109 = sbr.rel (0) target = $region49
    $region48: #{tpu_custom_call.1} parent=1 // pred_region
      _
    $region49: #{tpu_custom_call.1} parent=1 // pred_fallthru
      _
    // Predicated region
    $region50: #{tpu_custom_call.1} parent=1 // pred_check
      _
    $region51: #{tpu_custom_call.1} parent=1 // pred_check_branch
      %111 = sbr.rel (0) target = $region53
    $region52: #{tpu_custom_call.1} parent=1 // pred_region
      %112 = dma.done [#allocation3], 128
    $region53: #{tpu_custom_call.1} parent=1 // pred_fallthru
      _
    // Predicated region
    $region54: #{tpu_custom_call.1} parent=1 // pred_check
      _
    $region55: #{tpu_custom_call.1} parent=1 // pred_check_branch
      %114 = sbr.rel (0) target = $region57
    $region56: #{tpu_custom_call.1} parent=1 // pred_region
      %115 = dma.done [#allocation6], 128
    $region57: #{tpu_custom_call.1} parent=1 // pred_fallthru
      _
    // Predicated region
    $region58: #{tpu_custom_call.1} parent=1 // pred_check
      _
    $region59: #{tpu_custom_call.1} parent=1 // pred_check_branch
      %117 = sbr.rel (0) target = $region61
    $region60: #{tpu_custom_call.1} parent=1 // pred_region
      %118 = dma.done [#allocation6], 128
    $region61: #{tpu_custom_call.1} parent=1 // pred_fallthru
      _
    // Predicated region
    $region62: #{tpu_custom_call.1} parent=1 // pred_check
      _
    $region63: #{tpu_custom_call.1} parent=1 // pred_check_branch
      %120 = sbr.rel (0) target = $region65
    $region64: #{tpu_custom_call.1} parent=1 // pred_region
      %121 = dma.done [#allocation9], 256
    $region65: #{tpu_custom_call.1} parent=1 // pred_fallthru
      _
    // Predicated region
    $region66: #{tpu_custom_call.1} parent=1 // pred_check
      _
    $region67: #{tpu_custom_call.1} parent=1 // pred_check_branch
      %123 = sbr.rel (0) target = $region69
    $region68: #{tpu_custom_call.1} parent=1 // pred_region
      %124 = dma.done [#allocation9], 4096
    $region69: #{tpu_custom_call.1} parent=1 // pred_fallthru
      _
    // Predicated region
    $region70: #{tpu_custom_call.1} parent=1 // pred_check
      _
    $region71: #{tpu_custom_call.1} parent=1 // pred_check_branch
      %126 = sbr.rel (0) target = $region73
    $region72: #{tpu_custom_call.1} parent=1 // pred_region
      %127 = dma.done [#allocation12], 2048
    $region73: #{tpu_custom_call.1} parent=1 // pred_fallthru
      _
    // Predicated region
    $region74: #{tpu_custom_call.1} parent=1 // pred_check
      _
    $region75: #{tpu_custom_call.1} parent=1 // pred_check_branch
      %129 = sbr.rel (0) target = $region77
    $region76: #{tpu_custom_call.1} parent=1 // pred_region
      %130 = dma.done [#allocation12], 1024
    $region77: #{tpu_custom_call.1} parent=1 // pred_fallthru
      _
    %v132 = vld [vmem:[#allocation2] sm:$0xff]
    %v133 = vld [vmem:[#allocation7] sm:$0x7f]
    %v134 = vld [vmem:[%s3] sm:$0x1]
    %v136 = vlaneseq
    %v137 = vshrl.u32 %v136, 7
    %v138 = vsub.s32 0, %v137
    %v139 = vrot.slane %v134, %v138
    %vm141 = vcmask 56320
    %v143 = vsel %vm141, %v132, 0
    %vm145 = vcmask 1046528
    %v147 = vsel %vm145, %v133, 0
    %149 = vmatprep.subr.mxu0 0.0
    %150 = vmatpush1.msra.mxu0 %v147
    %151 = vmatprep.subr.mxu0 0.0
    %152 = vmatpush1.msra.mxu0 0.0
    %153 = vmatprep.subr.mxu0 0.0
    %154 = vmatpush1.msra.mxu0 0.0
    %155 = vmatprep.subr.mxu0 0.0
    %156 = vmatpush1.msra.mxu0 0.0
    %157 = vmatprep.subr.mxu0 0.0
    %158 = vmatpush1.msra.mxu0 0.0
    %159 = vmatprep.subr.mxu0 0.0
    %160 = vmatpush1.msra.mxu0 0.0
    %161 = vmatprep.subr.mxu0 0.0
    %162 = vmatpush1.msra.mxu0 0.0
    %163 = vmatprep.subr.mxu0 0.0
    %164 = vmatpush1.msra.mxu0 0.0
    %165 = vmatprep.subr.mxu0 0.0
    %166 = vmatpush1.msra.mxu0 0.0
    %167 = vmatprep.subr.mxu0 0.0
    %168 = vmatpush1.msra.mxu0 0.0
    %169 = vmatprep.subr.mxu0 0.0
    %170 = vmatpush1.msra.mxu0 0.0
    %171 = vmatprep.subr.mxu0 0.0
    %172 = vmatpush1.msra.mxu0 0.0
    %173 = vmatprep.subr.mxu0 0.0
    %174 = vmatpush1.msra.mxu0 0.0
    %175 = vmatprep.subr.mxu0 0.0
    %176 = vmatpush1.msra.mxu0 0.0
    %177 = vmatprep.subr.mxu0 0.0
    %178 = vmatpush1.msra.mxu0 0.0
    %179 = vmatprep.subr.mxu0 0.0
    %180 = vmatpush1.msra.mxu0 0.0
    %181 = vmatprep.subr.mxu0 0.0
    %182 = vmatpush1.msra.mxu0 0.0
    %183 = vmatprep.subr.mxu0 0.0
    %184 = vmatpush1.msra.mxu0 0.0
    %185 = vmatprep.subr.mxu0 0.0
    %186 = vmatpush1.msra.mxu0 0.0
    %187 = vmatprep.subr.mxu0 0.0
    %188 = vmatpush1.msra.mxu0 0.0
    %189 = vmatprep.subr.mxu0 0.0
    %190 = vmatpush1.msra.mxu0 0.0
    %191 = vmatprep.subr.mxu0 0.0
    %192 = vmatpush1.msra.mxu0 0.0
    %193 = vmatprep.subr.mxu0 0.0
    %194 = vmatpush1.msra.mxu0 0.0
    %195 = vmatprep.subr.mxu0 0.0
    %196 = vmatpush1.msra.mxu0 0.0
    %197 = vmatprep.subr.mxu0 0.0
    %198 = vmatpush1.msra.mxu0 0.0
    %199 = vmatprep.subr.mxu0 0.0
    %200 = vmatpush1.msra.mxu0 0.0
    %201 = vmatprep.subr.mxu0 0.0
    %202 = vmatpush1.msra.mxu0 0.0
    %203 = vmatprep.subr.mxu0 0.0
    %204 = vmatpush1.msra.mxu0 0.0
    %205 = vmatprep.subr.mxu0 0.0
    %206 = vmatpush1.msra.mxu0 0.0
    %207 = vmatprep.subr.mxu0 0.0
    %208 = vmatpush1.msra.mxu0 0.0
    %209 = vmatprep.subr.mxu0 0.0
    %210 = vmatpush1.msra.mxu0 0.0
    %211 = vmatprep.subr.mxu0 0.0
    %212 = vmatpush1.msra.mxu0 0.0
    %213 = vmatprep.mubr.f32.mxu0 0.0
    %214 = vmatmul.mubr.f32.gmra.mrb[0].mxu0 %v143
    %v215 = vpop.f32.mrb[0].mxu0
    %v216 = vadd.f32 %v139, %v215
    %v217 = vpop.f32.mrb[0].mxu0
    %218 = vdwg.mxu0
    %v219 = vmax.f32 %v216, 0.0
    %v220 = vld [vmem:[#allocation5] sm:$0xff]
    %v221 = vld [vmem:[#allocation8] sm:$0xff]
    %v222 = vld [vmem:[#allocation8 + $0x8] sm:$0xff]
    %v223 = vld [vmem:[%s5] sm:$0x1]
    %v225 = vlaneseq
    %v226 = vshrl.u32 %v225, 7
    %v227 = vsub.s32 0, %v226
    %v228 = vrot.slane %v223, %v227
    %vm230 = vcmask 130048
    %v232 = vsel %vm230, %v220, 0
    %234 = vmatprep.subr.mxu0 0.0
    %235 = vmatpush1.msra.mxu0 %v221
    %236 = vmatprep.subr.mxu0 0.0
    %237 = vmatpush1.msra.mxu0 %v222
    %238 = vmatprep.subr.mxu0 0.0
    %239 = vmatpush1.msra.mxu0 0.0
    %240 = vmatprep.subr.mxu0 0.0
    %241 = vmatpush1.msra.mxu0 0.0
    %242 = vmatprep.subr.mxu0 0.0
    %243 = vmatpush1.msra.mxu0 0.0
    %244 = vmatprep.subr.mxu0 0.0
    %245 = vmatpush1.msra.mxu0 0.0
    %246 = vmatprep.subr.mxu0 0.0
    %247 = vmatpush1.msra.mxu0 0.0
    %248 = vmatprep.subr.mxu0 0.0
    %249 = vmatpush1.msra.mxu0 0.0
    %250 = vmatprep.subr.mxu0 0.0
    %251 = vmatpush1.msra.mxu0 0.0
    %252 = vmatprep.subr.mxu0 0.0
    %253 = vmatpush1.msra.mxu0 0.0
    %254 = vmatprep.subr.mxu0 0.0
    %255 = vmatpush1.msra.mxu0 0.0
    %256 = vmatprep.subr.mxu0 0.0
    %257 = vmatpush1.msra.mxu0 0.0
    %258 = vmatprep.subr.mxu0 0.0
    %259 = vmatpush1.msra.mxu0 0.0
    %260 = vmatprep.subr.mxu0 0.0
    %261 = vmatpush1.msra.mxu0 0.0
    %262 = vmatprep.subr.mxu0 0.0
    %263 = vmatpush1.msra.mxu0 0.0
    %264 = vmatprep.subr.mxu0 0.0
    %265 = vmatpush1.msra.mxu0 0.0
    %266 = vmatprep.subr.mxu0 0.0
    %267 = vmatpush1.msra.mxu0 0.0
    %268 = vmatprep.subr.mxu0 0.0
    %269 = vmatpush1.msra.mxu0 0.0
    %270 = vmatprep.subr.mxu0 0.0
    %271 = vmatpush1.msra.mxu0 0.0
    %272 = vmatprep.subr.mxu0 0.0
    %273 = vmatpush1.msra.mxu0 0.0
    %274 = vmatprep.subr.mxu0 0.0
    %275 = vmatpush1.msra.mxu0 0.0
    %276 = vmatprep.subr.mxu0 0.0
    %277 = vmatpush1.msra.mxu0 0.0
    %278 = vmatprep.subr.mxu0 0.0
    %279 = vmatpush1.msra.mxu0 0.0
    %280 = vmatprep.subr.mxu0 0.0
    %281 = vmatpush1.msra.mxu0 0.0
    %282 = vmatprep.subr.mxu0 0.0
    %283 = vmatpush1.msra.mxu0 0.0
    %284 = vmatprep.subr.mxu0 0.0
    %285 = vmatpush1.msra.mxu0 0.0
    %286 = vmatprep.subr.mxu0 0.0
    %287 = vmatpush1.msra.mxu0 0.0
    %288 = vmatprep.subr.mxu0 0.0
    %289 = vmatpush1.msra.mxu0 0.0
    %290 = vmatprep.subr.mxu0 0.0
    %291 = vmatpush1.msra.mxu0 0.0
    %292 = vmatprep.subr.mxu0 0.0
    %293 = vmatpush1.msra.mxu0 0.0
    %294 = vmatprep.subr.mxu0 0.0
    %295 = vmatpush1.msra.mxu0 0.0
    %296 = vmatprep.subr.mxu0 0.0
    %297 = vmatpush1.msra.mxu0 0.0
    %298 = vmatprep.mubr.f32.mxu0 0.0
    %299 = vmatmul.mubr.f32.gmra.mrb[0].mxu0 %v232
    %v300 = vpop.f32.mrb[0].mxu0
    %v301 = vadd.f32 %v228, %v300
    %v302 = vpop.f32.mrb[0].mxu0
    %303 = vdwg.mxu0
    %v304 = vmax.f32 %v301, 0.0
    %v305 = vpack.c.bf16 %v219, %v219
    %v306 = vpack.c.bf16 %v304, %v304
    %v307 = vld [vmem:[#allocation10] sm:$0xff]
    %v308 = vld [vmem:[#allocation10 + $0x8] sm:$0xff]
    %v309 = vld [vmem:[#allocation10 + $0x10] sm:$0xff]
    %v310 = vld [vmem:[#allocation10 + $0x18] sm:$0xff]
    %v311 = vld [vmem:[#allocation10 + $0x20] sm:$0xff]
    %v312 = vld [vmem:[#allocation10 + $0x28] sm:$0xff]
    %v313 = vld [vmem:[#allocation10 + $0x30] sm:$0xff]
    %v314 = vld [vmem:[#allocation10 + $0x38] sm:$0xff]
    %v315 = vld [vmem:[#allocation10 + $0x40] sm:$0xff]
    %v316 = vld [vmem:[#allocation10 + $0x48] sm:$0xff]
    %v317 = vld [vmem:[#allocation10 + $0x50] sm:$0xff]
    %v318 = vld [vmem:[#allocation10 + $0x58] sm:$0xff]
    %v319 = vld [vmem:[#allocation10 + $0x60] sm:$0xff]
    %v320 = vld [vmem:[#allocation10 + $0x68] sm:$0xff]
    %v321 = vld [vmem:[#allocation10 + $0x70] sm:$0xff]
    %v322 = vld [vmem:[#allocation10 + $0x78] sm:$0xff]
    %v323 = vld [vmem:[#allocation10 + $0x80] sm:$0xff]
    %v324 = vld [vmem:[#allocation10 + $0x88] sm:$0xff]
    %v325 = vld [vmem:[#allocation10 + $0x90] sm:$0xff]
    %v326 = vld [vmem:[#allocation10 + $0x98] sm:$0xff]
    %v327 = vld [vmem:[#allocation10 + $0xa0] sm:$0xff]
    %v328 = vld [vmem:[#allocation10 + $0xa8] sm:$0xff]
    %v329 = vld [vmem:[#allocation10 + $0xb0] sm:$0xff]
    %v330 = vld [vmem:[#allocation10 + $0xb8] sm:$0xff]
    %v331 = vld [vmem:[#allocation10 + $0xc0] sm:$0xff]
    %v332 = vld [vmem:[#allocation10 + $0xc8] sm:$0xff]
    %v333 = vld [vmem:[#allocation10 + $0xd0] sm:$0xff]
    %v334 = vld [vmem:[#allocation10 + $0xd8] sm:$0xff]
    %v335 = vld [vmem:[#allocation10 + $0xe0] sm:$0xff]
    %v336 = vld [vmem:[#allocation10 + $0xe8] sm:$0xff]
    %v337 = vld [vmem:[#allocation10 + $0xf0] sm:$0xff]
    %v338 = vld [vmem:[#allocation10 + $0xf8] sm:$0xff]
    %v339 = vld [vmem:[%s7] sm:$0x3]
    %v341 = vlaneseq
    %v342 = vshrl.u32 %v341, 7
    %v343 = vsub.s32 0, %v342
    %v344 = vrot.slane %v339, %v343
    %v345 = vlaneseq
    %v346 = vshrl.u32 %v345, 7
    %v347 = vsub.s32 1, %v346
    %v348 = vrot.slane %v339, %v347
    %v383 = vunpack.c.l.b16 %v307
    %v384 = vunpack.c.h.b16 %v307
    %v385 = vunpack.c.l.b16 %v308
    %v386 = vunpack.c.h.b16 %v308
    %v387 = vunpack.c.l.b16 %v309
    %v388 = vunpack.c.h.b16 %v309
    %v389 = vunpack.c.l.b16 %v310
    %v390 = vunpack.c.h.b16 %v310
    %v391 = vunpack.c.l.b16 %v311
    %v392 = vunpack.c.h.b16 %v311
    %v393 = vunpack.c.l.b16 %v312
    %v394 = vunpack.c.h.b16 %v312
    %v395 = vunpack.c.l.b16 %v313
    %v396 = vunpack.c.h.b16 %v313
    %v397 = vunpack.c.l.b16 %v314
    %v398 = vunpack.c.h.b16 %v314
    %v399 = vunpack.c.l.b16 %v315
    %v400 = vunpack.c.h.b16 %v315
    %v401 = vunpack.c.l.b16 %v316
    %v402 = vunpack.c.h.b16 %v316
    %v403 = vunpack.c.l.b16 %v317
    %v404 = vunpack.c.h.b16 %v317
    %v405 = vunpack.c.l.b16 %v318
    %v406 = vunpack.c.h.b16 %v318
    %v407 = vunpack.c.l.b16 %v319
    %v408 = vunpack.c.h.b16 %v319
    %v409 = vunpack.c.l.b16 %v320
    %v410 = vunpack.c.h.b16 %v320
    %v411 = vunpack.c.l.b16 %v321
    %v412 = vunpack.c.h.b16 %v321
    %v413 = vunpack.c.l.b16 %v322
    %v414 = vunpack.c.h.b16 %v322
    %v415 = vunpack.c.l.b16 %v323
    %v416 = vunpack.c.h.b16 %v323
    %v417 = vunpack.c.l.b16 %v324
    %v418 = vunpack.c.h.b16 %v324
    %v419 = vunpack.c.l.b16 %v325
    %v420 = vunpack.c.h.b16 %v325
    %v421 = vunpack.c.l.b16 %v326
    %v422 = vunpack.c.h.b16 %v326
    %v423 = vunpack.c.l.b16 %v327
    %v424 = vunpack.c.h.b16 %v327
    %v425 = vunpack.c.l.b16 %v328
    %v426 = vunpack.c.h.b16 %v328
    %v427 = vunpack.c.l.b16 %v329
    %v428 = vunpack.c.h.b16 %v329
    %v429 = vunpack.c.l.b16 %v330
    %v430 = vunpack.c.h.b16 %v330
    %v431 = vunpack.c.l.b16 %v331
    %v432 = vunpack.c.h.b16 %v331
    %v433 = vunpack.c.l.b16 %v332
    %v434 = vunpack.c.h.b16 %v332
    %v435 = vunpack.c.l.b16 %v333
    %v436 = vunpack.c.h.b16 %v333
    %v437 = vunpack.c.l.b16 %v334
    %v438 = vunpack.c.h.b16 %v334
    %v439 = vunpack.c.l.b16 %v335
    %v440 = vunpack.c.h.b16 %v335
    %v441 = vunpack.c.l.b16 %v336
    %v442 = vunpack.c.h.b16 %v336
    %v443 = vunpack.c.l.b16 %v337
    %v444 = vunpack.c.h.b16 %v337
    %v445 = vunpack.c.l.b16 %v338
    %v446 = vunpack.c.h.b16 %v338
    %v447 = vpack.c.b16 %v385, %v383
    %v448 = vpack.c.b16 %v386, %v384
    %v449 = vpack.c.b16 %v389, %v387
    %v450 = vpack.c.b16 %v390, %v388
    %v451 = vpack.c.b16 %v393, %v391
    %v452 = vpack.c.b16 %v394, %v392
    %v453 = vpack.c.b16 %v397, %v395
    %v454 = vpack.c.b16 %v398, %v396
    %v455 = vpack.c.b16 %v401, %v399
    %v456 = vpack.c.b16 %v402, %v400
    %v457 = vpack.c.b16 %v405, %v403
    %v458 = vpack.c.b16 %v406, %v404
    %v459 = vpack.c.b16 %v409, %v407
    %v460 = vpack.c.b16 %v410, %v408
    %v461 = vpack.c.b16 %v413, %v411
    %v462 = vpack.c.b16 %v414, %v412
    %v463 = vpack.c.b16 %v417, %v415
    %v464 = vpack.c.b16 %v418, %v416
    %v465 = vpack.c.b16 %v421, %v419
    %v466 = vpack.c.b16 %v422, %v420
    %v467 = vpack.c.b16 %v425, %v423
    %v468 = vpack.c.b16 %v426, %v424
    %v469 = vpack.c.b16 %v429, %v427
    %v470 = vpack.c.b16 %v430, %v428
    %v471 = vpack.c.b16 %v433, %v431
    %v472 = vpack.c.b16 %v434, %v432
    %v473 = vpack.c.b16 %v437, %v435
    %v474 = vpack.c.b16 %v438, %v436
    %v475 = vpack.c.b16 %v441, %v439
    %v476 = vpack.c.b16 %v442, %v440
    %v477 = vpack.c.b16 %v445, %v443
    %v478 = vpack.c.b16 %v446, %v444
    %511 = vmatprep.subr.bf16.mxu0 %v448
    %512 = vmatpush1.bf16.msra.mxu0 %v447
    %513 = vmatprep.subr.bf16.mxu0 %v450
    %514 = vmatpush1.bf16.msra.mxu0 %v449
    %515 = vmatprep.subr.bf16.mxu0 %v452
    %516 = vmatpush1.bf16.msra.mxu0 %v451
    %517 = vmatprep.subr.bf16.mxu0 %v454
    %518 = vmatpush1.bf16.msra.mxu0 %v453
    %519 = vmatprep.subr.bf16.mxu0 %v456
    %520 = vmatpush1.bf16.msra.mxu0 %v455
    %521 = vmatprep.subr.bf16.mxu0 %v458
    %522 = vmatpush1.bf16.msra.mxu0 %v457
    %523 = vmatprep.subr.bf16.mxu0 %v460
    %524 = vmatpush1.bf16.msra.mxu0 %v459
    %525 = vmatprep.subr.bf16.mxu0 %v462
    %526 = vmatpush1.bf16.msra.mxu0 %v461
    %527 = vmatprep.subr.bf16.mxu0 %v464
    %528 = vmatpush1.bf16.msra.mxu0 %v463
    %529 = vmatprep.subr.bf16.mxu0 %v466
    %530 = vmatpush1.bf16.msra.mxu0 %v465
    %531 = vmatprep.subr.bf16.mxu0 %v468
    %532 = vmatpush1.bf16.msra.mxu0 %v467
    %533 = vmatprep.subr.bf16.mxu0 %v470
    %534 = vmatpush1.bf16.msra.mxu0 %v469
    %535 = vmatprep.subr.bf16.mxu0 %v472
    %536 = vmatpush1.bf16.msra.mxu0 %v471
    %537 = vmatprep.subr.bf16.mxu0 %v474
    %538 = vmatpush1.bf16.msra.mxu0 %v473
    %539 = vmatprep.subr.bf16.mxu0 %v476
    %540 = vmatpush1.bf16.msra.mxu0 %v475
    %541 = vmatprep.subr.bf16.mxu0 %v478
    %542 = vmatpush1.bf16.msra.mxu0 %v477
    %543 = vmatprep.mubr.bf16.mxu0 %v306
    %544 = vmatmul.mubr.bf16.gmra.mrb[0].mxu0 %v305
    %v545 = vpop.f32.mrb[0].mxu0
    %v546 = vadd.f32 %v344, %v545
    %v547 = vpop.f32.mrb[0].mxu0
    %v548 = vadd.f32 %v348, %v547
    %v549 = vpop.f32.mrb[0].mxu0
    %v550 = vpop.f32.mrb[0].mxu0
    %551 = vdwg.mxu0
    %v552 = vmax.f32 %v546, 0.0
    %v553 = vmax.f32 %v548, 0.0
    %v554 = vpack.c.bf16 %v552, %v552
    %v555 = vpack.c.bf16 %v553, %v553
    %v556 = vld [vmem:[#allocation11] sm:$0xf]
    %v557 = vld [vmem:[#allocation11 + $0x4] sm:$0xf]
    %v558 = vld [vmem:[#allocation11 + $0x8] sm:$0xf]
    %v559 = vld [vmem:[#allocation11 + $0xc] sm:$0xf]
    %v560 = vld [vmem:[#allocation11 + $0x10] sm:$0xf]
    %v561 = vld [vmem:[#allocation11 + $0x14] sm:$0xf]
    %v562 = vld [vmem:[#allocation11 + $0x18] sm:$0xf]
    %v563 = vld [vmem:[#allocation11 + $0x1c] sm:$0xf]
    %v564 = vld [vmem:[#allocation11 + $0x20] sm:$0xf]
    %v565 = vld [vmem:[#allocation11 + $0x24] sm:$0xf]
    %v566 = vld [vmem:[#allocation11 + $0x28] sm:$0xf]
    %v567 = vld [vmem:[#allocation11 + $0x2c] sm:$0xf]
    %v568 = vld [vmem:[#allocation11 + $0x30] sm:$0xf]
    %v569 = vld [vmem:[#allocation11 + $0x34] sm:$0xf]
    %v570 = vld [vmem:[#allocation11 + $0x38] sm:$0xf]
    %v571 = vld [vmem:[#allocation11 + $0x3c] sm:$0xf]
    %v572 = vld [vmem:[#allocation11 + $0x40] sm:$0xf]
    %v573 = vld [vmem:[#allocation11 + $0x44] sm:$0xf]
    %v574 = vld [vmem:[#allocation11 + $0x48] sm:$0xf]
    %v575 = vld [vmem:[#allocation11 + $0x4c] sm:$0xf]
    %v576 = vld [vmem:[#allocation11 + $0x50] sm:$0xf]
    %v577 = vld [vmem:[#allocation11 + $0x54] sm:$0xf]
    %v578 = vld [vmem:[#allocation11 + $0x58] sm:$0xf]
    %v579 = vld [vmem:[#allocation11 + $0x5c] sm:$0xf]
    %v580 = vld [vmem:[#allocation11 + $0x60] sm:$0xf]
    %v581 = vld [vmem:[#allocation11 + $0x64] sm:$0xf]
    %v582 = vld [vmem:[#allocation11 + $0x68] sm:$0xf]
    %v583 = vld [vmem:[#allocation11 + $0x6c] sm:$0xf]
    %v584 = vld [vmem:[#allocation11 + $0x70] sm:$0xf]
    %v585 = vld [vmem:[#allocation11 + $0x74] sm:$0xf]
    %v586 = vld [vmem:[#allocation11 + $0x78] sm:$0xf]
    %v587 = vld [vmem:[#allocation11 + $0x7c] sm:$0xf]
    %v588 = vld [vmem:[%s9] sm:$0x1]
    %v590 = vlaneseq
    %v591 = vshrl.u32 %v590, 7
    %v592 = vsub.s32 0, %v591
    %v593 = vrot.slane %v588, %v592
    %v627 = vunpack.c.l.b16 %v556
    %v628 = vunpack.c.l.b16 %v557
    %v629 = vunpack.c.l.b16 %v558
    %v630 = vunpack.c.l.b16 %v559
    %v631 = vunpack.c.l.b16 %v560
    %v632 = vunpack.c.l.b16 %v561
    %v633 = vunpack.c.l.b16 %v562
    %v634 = vunpack.c.l.b16 %v563
    %v635 = vunpack.c.l.b16 %v564
    %v636 = vunpack.c.l.b16 %v565
    %v637 = vunpack.c.l.b16 %v566
    %v638 = vunpack.c.l.b16 %v567
    %v639 = vunpack.c.l.b16 %v568
    %v640 = vunpack.c.l.b16 %v569
    %v641 = vunpack.c.l.b16 %v570
    %v642 = vunpack.c.l.b16 %v571
    %v643 = vunpack.c.l.b16 %v572
    %v644 = vunpack.c.l.b16 %v573
    %v645 = vunpack.c.l.b16 %v574
    %v646 = vunpack.c.l.b16 %v575
    %v647 = vunpack.c.l.b16 %v576
    %v648 = vunpack.c.l.b16 %v577
    %v649 = vunpack.c.l.b16 %v578
    %v650 = vunpack.c.l.b16 %v579
    %v651 = vunpack.c.l.b16 %v580
    %v652 = vunpack.c.l.b16 %v581
    %v653 = vunpack.c.l.b16 %v582
    %v654 = vunpack.c.l.b16 %v583
    %v655 = vunpack.c.l.b16 %v584
    %v656 = vunpack.c.l.b16 %v585
    %v657 = vunpack.c.l.b16 %v586
    %v658 = vunpack.c.l.b16 %v587
    %v659 = vpack.c.b16 %v628, %v627
    %v660 = vpack.c.b16 %v630, %v629
    %v661 = vpack.c.b16 %v632, %v631
    %v662 = vpack.c.b16 %v634, %v633
    %v663 = vpack.c.b16 %v636, %v635
    %v664 = vpack.c.b16 %v638, %v637
    %v665 = vpack.c.b16 %v640, %v639
    %v666 = vpack.c.b16 %v642, %v641
    %v667 = vpack.c.b16 %v644, %v643
    %v668 = vpack.c.b16 %v646, %v645
    %v669 = vpack.c.b16 %v648, %v647
    %v670 = vpack.c.b16 %v650, %v649
    %v671 = vpack.c.b16 %v652, %v651
    %v672 = vpack.c.b16 %v654, %v653
    %v673 = vpack.c.b16 %v656, %v655
    %v674 = vpack.c.b16 %v658, %v657
    %691 = vmatprep.subr.bf16.mxu0 0
    %692 = vmatpush1.bf16.msra.mxu0 %v659
    %693 = vmatprep.subr.bf16.mxu0 0
    %694 = vmatpush1.bf16.msra.mxu0 %v660
    %695 = vmatprep.subr.bf16.mxu0 0
    %696 = vmatpush1.bf16.msra.mxu0 %v661
    %697 = vmatprep.subr.bf16.mxu0 0
    %698 = vmatpush1.bf16.msra.mxu0 %v662
    %699 = vmatprep.subr.bf16.mxu0 0
    %700 = vmatpush1.bf16.msra.mxu0 %v663
    %701 = vmatprep.subr.bf16.mxu0 0
    %702 = vmatpush1.bf16.msra.mxu0 %v664
    %703 = vmatprep.subr.bf16.mxu0 0
    %704 = vmatpush1.bf16.msra.mxu0 %v665
    %705 = vmatprep.subr.bf16.mxu0 0
    %706 = vmatpush1.bf16.msra.mxu0 %v666
    %707 = vmatprep.subr.bf16.mxu0 0
    %708 = vmatpush1.bf16.msra.mxu0 %v667
    %709 = vmatprep.subr.bf16.mxu0 0
    %710 = vmatpush1.bf16.msra.mxu0 %v668
    %711 = vmatprep.subr.bf16.mxu0 0
    %712 = vmatpush1.bf16.msra.mxu0 %v669
    %713 = vmatprep.subr.bf16.mxu0 0
    %714 = vmatpush1.bf16.msra.mxu0 %v670
    %715 = vmatprep.subr.bf16.mxu0 0
    %716 = vmatpush1.bf16.msra.mxu0 %v671
    %717 = vmatprep.subr.bf16.mxu0 0
    %718 = vmatpush1.bf16.msra.mxu0 %v672
    %719 = vmatprep.subr.bf16.mxu0 0
    %720 = vmatpush1.bf16.msra.mxu0 %v673
    %721 = vmatprep.subr.bf16.mxu0 0
    %722 = vmatpush1.bf16.msra.mxu0 %v674
    %723 = vmatprep.mubr.bf16.mxu0 %v555
    %724 = vmatmul.mubr.bf16.gmra.mrb[0].mxu0 %v554
    %v725 = vpop.f32.mrb[0].mxu0
    %v726 = vadd.f32 %v593, %v725
    %v727 = vpop.f32.mrb[0].mxu0
    %v728 = vpop.f32.mrb[0].mxu0
    %v729 = vpop.f32.mrb[0].mxu0
    %730 = vdwg.mxu0
    %v731 = vmax.f32 %v726, 0.0
    %v732 = vpack.c.bf16 %v731, %v731
    %v733 = vld [vmem:[#allocation13] sm:$0xf]
    %v734 = vld [vmem:[#allocation13 + $0x4] sm:$0xf]
    %v735 = vld [vmem:[#allocation13 + $0x8] sm:$0xf]
    %v736 = vld [vmem:[#allocation13 + $0xc] sm:$0xf]
    %v737 = vld [vmem:[#allocation13 + $0x10] sm:$0xf]
    %v738 = vld [vmem:[#allocation13 + $0x14] sm:$0xf]
    %v739 = vld [vmem:[#allocation13 + $0x18] sm:$0xf]
    %v740 = vld [vmem:[#allocation13 + $0x1c] sm:$0xf]
    %v741 = vld [vmem:[#allocation13 + $0x20] sm:$0xf]
    %v742 = vld [vmem:[#allocation13 + $0x24] sm:$0xf]
    %v743 = vld [vmem:[#allocation13 + $0x28] sm:$0xf]
    %v744 = vld [vmem:[#allocation13 + $0x2c] sm:$0xf]
    %v745 = vld [vmem:[#allocation13 + $0x30] sm:$0xf]
    %v746 = vld [vmem:[#allocation13 + $0x34] sm:$0xf]
    %v747 = vld [vmem:[#allocation13 + $0x38] sm:$0xf]
    %v748 = vld [vmem:[#allocation13 + $0x3c] sm:$0xf]
    %v765 = vunpack.c.l.b16 %v733
    %v766 = vunpack.c.l.b16 %v734
    %v767 = vunpack.c.l.b16 %v735
    %v768 = vunpack.c.l.b16 %v736
    %v769 = vunpack.c.l.b16 %v737
    %v770 = vunpack.c.l.b16 %v738
    %v771 = vunpack.c.l.b16 %v739
    %v772 = vunpack.c.l.b16 %v740
    %v773 = vunpack.c.l.b16 %v741
    %v774 = vunpack.c.l.b16 %v742
    %v775 = vunpack.c.l.b16 %v743
    %v776 = vunpack.c.l.b16 %v744
    %v777 = vunpack.c.l.b16 %v745
    %v778 = vunpack.c.l.b16 %v746
    %v779 = vunpack.c.l.b16 %v747
    %v780 = vunpack.c.l.b16 %v748
    %v781 = vpack.c.b16 %v766, %v765
    %v782 = vpack.c.b16 %v768, %v767
    %v783 = vpack.c.b16 %v770, %v769
    %v784 = vpack.c.b16 %v772, %v771
    %v785 = vpack.c.b16 %v774, %v773
    %v786 = vpack.c.b16 %v776, %v775
    %v787 = vpack.c.b16 %v778, %v777
    %v788 = vpack.c.b16 %v780, %v779
    %797 = vmatprep.subr.bf16.mxu0 0
    %798 = vmatpush1.bf16.msra.mxu0 %v781
    %799 = vmatprep.subr.bf16.mxu0 0
    %800 = vmatpush1.bf16.msra.mxu0 %v782
    %801 = vmatprep.subr.bf16.mxu0 0
    %802 = vmatpush1.bf16.msra.mxu0 %v783
    %803 = vmatprep.subr.bf16.mxu0 0
    %804 = vmatpush1.bf16.msra.mxu0 %v784
    %805 = vmatprep.subr.bf16.mxu0 0
    %806 = vmatpush1.bf16.msra.mxu0 %v785
    %807 = vmatprep.subr.bf16.mxu0 0
    %808 = vmatpush1.bf16.msra.mxu0 %v786
    %809 = vmatprep.subr.bf16.mxu0 0
    %810 = vmatpush1.bf16.msra.mxu0 %v787
    %811 = vmatprep.subr.bf16.mxu0 0
    %812 = vmatpush1.bf16.msra.mxu0 %v788
    %813 = vmatprep.subr.bf16.mxu0 0
    %814 = vmatpush1.bf16.msra.mxu0 0
    %815 = vmatprep.subr.bf16.mxu0 0
    %816 = vmatpush1.bf16.msra.mxu0 0
    %817 = vmatprep.subr.bf16.mxu0 0
    %818 = vmatpush1.bf16.msra.mxu0 0
    %819 = vmatprep.subr.bf16.mxu0 0
    %820 = vmatpush1.bf16.msra.mxu0 0
    %821 = vmatprep.subr.bf16.mxu0 0
    %822 = vmatpush1.bf16.msra.mxu0 0
    %823 = vmatprep.subr.bf16.mxu0 0
    %824 = vmatpush1.bf16.msra.mxu0 0
    %825 = vmatprep.subr.bf16.mxu0 0
    %826 = vmatpush1.bf16.msra.mxu0 0
    %827 = vmatprep.subr.bf16.mxu0 0
    %828 = vmatpush1.bf16.msra.mxu0 0
    %829 = vmatprep.mubr.bf16.mxu0 0
    %830 = vmatmul.mubr.bf16.gmra.mrb[0].mxu0 %v732
    %v831 = vpop.f32.mrb[0].mxu0
    %v832 = vadd.f32 0.0, %v831
    %v833 = vpop.f32.mrb[0].mxu0
    %v834 = vpop.f32.mrb[0].mxu0
    %v835 = vpop.f32.mrb[0].mxu0
    %836 = vdwg.mxu0
    %v837 = vld [vmem:[%s11] sm:$0x1]
    %v839 = vlaneseq
    %v840 = vshrl.u32 %v839, 7
    %v841 = vsub.s32 0, %v840
    %v842 = vrot.slane %v837, %v841
    %v844 = vadd.f32 %v832, %v842
    %vm845 = vcmask 64512
    %v846 = vsel %vm845, %v844, -inf
    %847 = vmax.xlane.f32.xlu0 %v846
    %v848 = vpop.xlane.xlu0 %847
    %v849 = vsub.f32 %v844, %v848
    %v850 = vmul.f32 %v849, 1.442695
    %v851 = vpow.pop %v850
    %v852 = vsel %vm845, %v851, 0.0
    %853 = vadd.xlane.f32.xlu0 %v852
    %v854 = vpop.xlane.xlu0 %853
    %v855 = vrcp.pop %v854
    %v856 = vmul.f32 1.0, %v855
    %v857 = vmul.f32 %v851, %v856
    %858 = vst.msk [vmem:[#allocation14] sm:$0xff] %vm845, %v857
    // Predicated region
    $region78: #{tpu_custom_call.1} parent=1 // pred_check
      _
    $region79: #{tpu_custom_call.1} parent=1 // pred_check_branch
      %860 = sbr.rel (0) target = $region81
    $region80: #{tpu_custom_call.1} parent=1 // pred_region
      %s862 = ssub.s32 128, 128
      %863 = vsyncadd [#allocation4], %s862
      %s865 = sshll.u32 [#allocation14], 4
      %s866 = int_to_ptr.vmem [resolvable:$true] %s865
      %868 = dma.vmem_to_hbm [thread:$0]  %s866, 128, %s12, [#allocation4]
    $region81: #{tpu_custom_call.1} parent=1 // pred_fallthru
      _
    // Predicated region
    $region82: #{tpu_custom_call.1} parent=1 // pred_check
      _
    $region83: #{tpu_custom_call.1} parent=1 // pred_check_branch
      %870 = sbr.rel (0) target = $region85
    $region84: #{tpu_custom_call.1} parent=1 // pred_region
      %871 = dma.done [#allocation4], 128
    $region85: #{tpu_custom_call.1} parent=1 // pred_fallthru
      _
    %872 = vsyncpa [#allocation3], 1
    %873 = vsyncpa [#allocation6], 1
    %874 = vsyncpa [#allocation9], 1
    %875 = vsyncpa [#allocation12], 1
    %876 = vsyncpa [#allocation4], 1

</llo_original>
